<compile_context>
chip_gen: v7x
topology: tpu7x:2x2x1
jax: 0.10.0
libtpu: 0.0.40
codegen_flags: <defaults>
</compile_context>

<pallas_src>
import jax
import jax.numpy as jnp
from jax.experimental import pallas as pl
from jax.experimental.pallas import tpu as pltpu

N_BITS = 8
SYM = False            # module default
SIGN = True            # min_range (-0.5) < 0 after enable_observer()

LANE_W = 512           # lane-dense last dim (wide multiple of 128)
MAX_TILE_ROWS = 1024   # 1024 x 512 f32 = 2 MiB per block buffer


def _round_up(a, b):
    return ((a + b - 1) // b) * b


def _fq_asym_kernel(minr_ref, maxr_ref, x_ref, o_ref):
    """Asymmetric per-tensor fake quantize (sym=False path)."""
    qmax = float(2 ** N_BITS - 1)
    # Scalar prep, hoisted: computed once per grid step, not per element.
    min_r = minr_ref[0]
    max_r = maxr_ref[0]
    delta = (max_r - min_r) / qmax            # grad_scale is identity in fwd
    # NOTE: if max_range == min_range, delta == 0 and the result is inf/NaN,
    # matching the reference module (no clamp in the spec).
    inv_delta = 1.0 / delta                   # scalar reciprocal, exact
    zp = min_r
    x = x_ref[...]
    q = jnp.round((x - zp) * inv_delta)       # round_ste fwd == round
    o_ref[...] = (delta * jnp.clip(q, 0.0, qmax) + zp).astype(o_ref.dtype)


def _fq_sym_kernel(minr_ref, maxr_ref, x_ref, o_ref):
    """Symmetric per-tensor fake quantize (sym=True path)."""
    if SIGN:
        qmin = float(-(2 ** (N_BITS - 1)))
        qmax = float(2 ** (N_BITS - 1) - 1)
    else:
        qmin = 0.0
        qmax = float(2 ** N_BITS - 1)
    levels = float(2 ** N_BITS - 1)
    min_r = minr_ref[0]
    max_r = maxr_ref[0]
    max_abs = jnp.maximum(jnp.abs(min_r), jnp.abs(max_r))
    delta = 2.0 * max_abs / levels
    inv_delta = 1.0 / delta
    x = x_ref[...]
    q = jnp.round(x * inv_delta)
    o_ref[...] = (delta * jnp.clip(q, qmin, qmax)).astype(o_ref.dtype)


def gradient_activation_fake_quantize(x, min_range, max_range, sym=SYM):
    """Forward pass of GradientActivationFakeQuantize (non-observer mode).

    x:          float array, any shape (per-tensor quantization)
    min_range:  float32 array of shape (1,)   (nn.Parameter [-0.5])
    max_range:  float32 array of shape (1,)   (nn.Parameter [ 0.5])
    """
    orig_shape = x.shape
    n = x.size

    # Flatten to a lane-dense 2D slab (rows, LANE_W); zero-pad so the grid
    # tiles it exactly with bounded, (8,128)-aligned blocks.
    rows = _round_up(n, LANE_W) // LANE_W
    tile_rows = min(MAX_TILE_ROWS, _round_up(rows, 8))
    rows_padded = _round_up(rows, tile_rows)
    total = rows_padded * LANE_W

    flat = x.reshape(-1)
    if total != n:
        flat = jnp.pad(flat, (0, total - n))
    x2d = flat.reshape(rows_padded, LANE_W)

    grid = (rows_padded // tile_rows,)
    kernel = _fq_sym_kernel if sym else _fq_asym_kernel

    out2d = pl.pallas_call(
        kernel,
        out_shape=jax.ShapeDtypeStruct((rows_padded, LANE_W), x.dtype),
        grid_spec=pltpu.PrefetchScalarGridSpec(
            num_scalar_prefetch=0,
            grid=grid,
            in_specs=[
                pl.BlockSpec(memory_space=pltpu.MemorySpace.SMEM),    # min_range
                pl.BlockSpec(memory_space=pltpu.MemorySpace.SMEM),    # max_range
                pl.BlockSpec((tile_rows, LANE_W), lambda i: (i, 0)),  # x tile
            ],
            out_specs=pl.BlockSpec((tile_rows, LANE_W), lambda i: (i, 0)),
        ),
        # TODO(synk): on v7x, pltpu.CORE_PARALLEL would additionally shard this
        # grid axis across both TensorCores; kept as "parallel" for portability.
        compiler_params=pltpu.CompilerParams(
            dimension_semantics=("parallel",)),
    )(min_range, max_range, x2d)

    return out2d.reshape(-1)[:n].reshape(orig_shape)


# --------------------------- pure-JAX references ---------------------------

def _reference_asym(x, min_range, max_range):
    qmax = float(2 ** N_BITS - 1)
    delta = (max_range[0] - min_range[0]) / qmax
    inv_delta = 1.0 / delta
    zp = min_range[0]
    q = jnp.round((x - zp) * inv_delta)
    return delta * jnp.clip(q, 0.0, qmax) + zp


def _reference_sym(x, min_range, max_range, sign=SIGN):
    qmin = float(-(2 ** (N_BITS - 1))) if sign else 0.0
    qmax = float(2 ** (N_BITS - 1) - 1) if sign else float(2 ** N_BITS - 1)
    levels = float(2 ** N_BITS - 1)
    max_abs = jnp.maximum(jnp.abs(min_range[0]), jnp.abs(max_range[0]))
    delta = 2.0 * max_abs / levels
    inv_delta = 1.0 / delta
    q = jnp.round(x * inv_delta)
    return delta * jnp.clip(q, qmin, qmax)


if __name__ == "__main__":
    key = jax.random.PRNGKey(0)
    k1, k2 = jax.random.split(key)

    # Parameters from __init__ (deterministic, post-"calibration" state)
    min_range = jnp.array([-0.5], dtype=jnp.float32)
    max_range = jnp.array([0.5], dtype=jnp.float32)

    # NCHW activation, small shape
    x = jax.random.normal(k1, (2, 4, 16, 16), dtype=jnp.float32) * 0.3

    # --- default asymmetric path ---
    y = gradient_activation_fake_quantize(x, min_range, max_range, sym=False)
    y = jax.block_until_ready(y)
    y_ref = _reference_asym(x, min_range, max_range)
    assert y.shape == x.shape and y.dtype == x.dtype
    assert jnp.max(jnp.abs(y - y_ref)) < 1e-6

    # --- odd, non-lane-divisible shape (exercises the padding path) ---
    x_odd = jax.random.normal(k2, (3, 5, 7), dtype=jnp.float32) * 0.3
    y_odd = gradient_activation_fake_quantize(x_odd, min_range, max_range, sym=False)
    y_odd = jax.block_until_ready(y_odd)
    assert y_odd.shape == x_odd.shape
    assert jnp.max(jnp.abs(y_odd - _reference_asym(x_odd, min_range, max_range))) < 1e-6

    # --- symmetric path ---
    y_sym = gradient_activation_fake_quantize(x, min_range, max_range, sym=True)
    y_sym = jax.block_until_ready(y_sym)
    assert jnp.max(jnp.abs(y_sym - _reference_sym(x, min_range, max_range))) < 1e-6

    print("KERNEL_OK")
</pallas_src>

<mosaic_0001>
module attributes {stable_mosaic.version = 11 : i64} {
  func.func @_fq_asym_kernel(%arg0: i32, %arg1: memref<1xf32, #tpu.memory_space<smem>>, %arg2: memref<1xf32, #tpu.memory_space<smem>>, %arg3: memref<8x512xf32, #tpu.memory_space<vmem>>, %arg4: memref<8x512xf32, #tpu.memory_space<vmem>>) attributes {dimension_semantics = [#tpu.dimension_semantics<parallel>], iteration_bounds = array<i64: 1>, scalar_prefetch = 0 : i64, scratch_operands = 0 : i64, tpu.core_type = #tpu.core_type<tc>, window_params = [{transform_indices = @transform_0, window_bounds = array<i64: 1>}, {transform_indices = @transform_1, window_bounds = array<i64: 1>}, {transform_indices = @transform_2, window_bounds = array<i64: 8, 512>}, {transform_indices = @transform_3, window_bounds = array<i64: 8, 512>}]} {
    %c0 = arith.constant 0 : index
    %0 = memref.load %arg1[%c0] : memref<1xf32, #tpu.memory_space<smem>>
    %c0_0 = arith.constant 0 : index
    %1 = memref.load %arg2[%c0_0] : memref<1xf32, #tpu.memory_space<smem>>
    %2 = arith.subf %1, %0 : f32
    %cst = arith.constant 2.550000e+02 : f32
    %3 = arith.divf %2, %cst : f32
    %cst_1 = arith.constant 1.000000e+00 : f32
    %4 = arith.divf %cst_1, %3 : f32
    %c0_2 = arith.constant 0 : index
    %c0_3 = arith.constant 0 : index
    %5 = vector.load %arg3[%c0_2, %c0_3] : memref<8x512xf32, #tpu.memory_space<vmem>>, vector<8x512xf32>
    %6 = vector.broadcast %0 : f32 to vector<8x512xf32>
    %7 = arith.subf %5, %6 : vector<8x512xf32>
    %8 = vector.broadcast %4 : f32 to vector<8x512xf32>
    %9 = arith.mulf %7, %8 : vector<8x512xf32>
    %10 = math.roundeven %9 : vector<8x512xf32>
    %cst_4 = arith.constant 0.000000e+00 : f32
    %cst_5 = arith.constant 2.550000e+02 : f32
    %11 = vector.broadcast %cst_4 : f32 to vector<8x512xf32>
    %12 = arith.maximumf %11, %10 : vector<8x512xf32>
    %13 = vector.broadcast %cst_5 : f32 to vector<8x512xf32>
    %14 = arith.minimumf %13, %12 : vector<8x512xf32>
    %15 = vector.broadcast %3 : f32 to vector<8x512xf32>
    %16 = arith.mulf %15, %14 : vector<8x512xf32>
    %17 = vector.broadcast %0 : f32 to vector<8x512xf32>
    %18 = arith.addf %16, %17 : vector<8x512xf32>
    %c0_6 = arith.constant 0 : index
    %c0_7 = arith.constant 0 : index
    %19 = vector.load %arg4[%c0_6, %c0_7] : memref<8x512xf32, #tpu.memory_space<vmem>>, vector<8x512xf32>
    tpu.vector_store %arg4[%c0_6, %c0_7], %18 {strides = array<i32>} : memref<8x512xf32, #tpu.memory_space<vmem>>, vector<8x512xf32>,
    return
  }
  func.func @transform_0(%arg0: i32) -> i32 {
    %c0_i32 = arith.constant 0 : i32
    %c0_i32_0 = arith.constant 0 : i32
    return %c0_i32 : i32
  }
  func.func @transform_1(%arg0: i32) -> i32 {
    %c0_i32 = arith.constant 0 : i32
    %c0_i32_0 = arith.constant 0 : i32
    return %c0_i32 : i32
  }
  func.func @transform_2(%arg0: i32) -> (i32, i32) {
    %c0_i32 = arith.constant 0 : i32
    %c0_i32_0 = arith.constant 0 : i32
    return %arg0, %c0_i32 : i32, i32
  }
  func.func @transform_3(%arg0: i32) -> (i32, i32) {
    %c0_i32 = arith.constant 0 : i32
    %c0_i32_0 = arith.constant 0 : i32
    return %arg0, %c0_i32 : i32, i32
  }
}

</mosaic_0001>

<llo_original>
// kernel: tpu_custom_call.1
$region0: #{tpu_custom_call.1}
  #allocation0 [shape = 'u32[]', space=smem, size = 0x4, offset = 0x4, fixed_abs, tag = 'smem constant byte address 0x4 - core index']
  #allocation1 [shape = 'u32[144,128]{1,0:T(1,128)}', space=vmem, size = 0x12000, scoped, tag = 'internal scratch']
  #allocation2 [shape = 'f32[1]{0:T(128)S(6)}', space=smem, size = 0x200, scoped, tag = 'scoped memory for tpu_custom_call.1']
  #allocation3 [shape = 'f32[1]{0:T(128)S(6)}', space=smem, size = 0x200, scoped, tag = 'scoped memory for tpu_custom_call.1']
  %s0 = inlined_call_operand.<no memory space> [shape: f32[1], index: 0, kind: input, shape index: {}]
  %s1 = inlined_call_operand.<no memory space> [shape: f32[1], index: 1, kind: input, shape index: {}]
  %s2 = inlined_call_operand.hbm [shape: f32[8,512], index: 2, kind: input, shape index: {}]
  %s3 = inlined_call_operand.hbm [shape: f32[8,512], index: 3, kind: output, shape index: {}]
  %s4 = sld [smem:[#allocation0]]
  $region26: #{tpu_custom_call.1} parent=0
    _
  %s6 = ssub.s32 1, %s4
  %s7 = scalar_select 0, %s6, %s4
  %8 = sst [smem:[#allocation2]] %s0
  %9 = sst [smem:[#allocation3]] %s1
  $region1: #{tpu_custom_call.1} parent=0
    #allocation4 [shape = 'u8[16384]{0}', space=vmem, size = 0x4000, scoped, tag = 'input window, operand 2, single buffered']
    #allocation5 [shape = 's32[1]{0}', space=sflag, size = 0x4, scoped, tag = 'scoped memory for tpu_custom_call.1']
    #allocation6 [shape = 's32[1]{0}', space=sflag, size = 0x4, scoped, tag = 'scoped memory for tpu_custom_call.1']
    #allocation7 [shape = 'u8[16384]{0}', space=vmem, size = 0x4000, scoped, tag = 'output window, operand 0, single buffered']
    %10 = vsyncpa [#allocation5], 0
    %11 = vsyncpa [#allocation6], 0
    // Predicated region
    $region2: #{tpu_custom_call.1} parent=1 // pred_check
      _
    $region3: #{tpu_custom_call.1} parent=1 // pred_check_branch
      %13 = sbr.rel (0) target = $region5
    $region4: #{tpu_custom_call.1} parent=1 // pred_region
      _
    $region5: #{tpu_custom_call.1} parent=1 // pred_fallthru
      _
    // Predicated region
    $region6: #{tpu_custom_call.1} parent=1 // pred_check
      _
    $region7: #{tpu_custom_call.1} parent=1 // pred_check_branch
      %15 = sbr.rel (0) target = $region9
    $region8: #{tpu_custom_call.1} parent=1 // pred_region
      _
    $region9: #{tpu_custom_call.1} parent=1 // pred_fallthru
      _
    // Predicated region
    $region10: #{tpu_custom_call.1} parent=1 // pred_check
      _
    $region11: #{tpu_custom_call.1} parent=1 // pred_check_branch
      %17 = sbr.rel (0) target = $region13
    $region12: #{tpu_custom_call.1} parent=1 // pred_region
      %s19 = ssub.s32 512, 512
      %20 = vsyncadd [#allocation5], %s19
      %s22 = sshll.u32 [#allocation4], 4
      %s23 = int_to_ptr.vmem [resolvable:$true] %s22
      %25 = dma.hbm_to_vmem [thread:$0]  %s2, 512, %s23, [#allocation5]
    $region13: #{tpu_custom_call.1} parent=1 // pred_fallthru
      _
    // Predicated region
    $region14: #{tpu_custom_call.1} parent=1 // pred_check
      _
    $region15: #{tpu_custom_call.1} parent=1 // pred_check_branch
      %27 = sbr.rel (0) target = $region17
    $region16: #{tpu_custom_call.1} parent=1 // pred_region
      %28 = dma.done [#allocation5], 512
    $region17: #{tpu_custom_call.1} parent=1 // pred_fallthru
      _
    %s29 = sld [smem:[#allocation2]]
    %s30 = sld [smem:[#allocation3]]
    %s31 = ssub.f32 %s30, %s29
    %v32 = vrcp.pop 255.0
    %s33 = vtos %v32
    %s34 = smul.f32 %s31, %s33
    %v35 = vstv %s34
    %v36 = vrcp.pop %v35
    %s37 = vtos %v36
    %v38 = vld [vmem:[#allocation4] sm:$0xff]
    %v39 = vld [vmem:[#allocation4 + $0x8] sm:$0xff]
    %v40 = vld [vmem:[#allocation4 + $0x10] sm:$0xff]
    %v41 = vld [vmem:[#allocation4 + $0x18] sm:$0xff]
    %v42 = vstv %s29
    %v43 = vsub.f32 %v38, %v42
    %v44 = vsub.f32 %v39, %v42
    %v45 = vsub.f32 %v40, %v42
    %v46 = vsub.f32 %v41, %v42
    %v47 = vstv %s37
    %v48 = vmul.f32 %v43, %v47
    %v49 = vmul.f32 %v44, %v47
    %v50 = vmul.f32 %v45, %v47
    %v51 = vmul.f32 %v46, %v47
    %v52 = vround.ne.pseudo %v48
    %v53 = vround.ne.pseudo %v49
    %v54 = vround.ne.pseudo %v50
    %v55 = vround.ne.pseudo %v51
    %v56 = vmax.f32 %v52, 0.0
    %v57 = vmax.f32 %v53, 0.0
    %v58 = vmax.f32 %v54, 0.0
    %v59 = vmax.f32 %v55, 0.0
    %v60 = vmin.f32 %v56, 255.0
    %v61 = vmin.f32 %v57, 255.0
    %v62 = vmin.f32 %v58, 255.0
    %v63 = vmin.f32 %v59, 255.0
    %v64 = vstv %s34
    %v65 = vmul.f32 %v64, %v60
    %v66 = vmul.f32 %v64, %v61
    %v67 = vmul.f32 %v64, %v62
    %v68 = vmul.f32 %v64, %v63
    %v69 = vadd.f32 %v65, %v42
    %v70 = vadd.f32 %v66, %v42
    %v71 = vadd.f32 %v67, %v42
    %v72 = vadd.f32 %v68, %v42
    %73 = vst [vmem:[#allocation7] sm:$0xff] %v69
    %74 = vst [vmem:[#allocation7 + $0x8] sm:$0xff] %v70
    %75 = vst [vmem:[#allocation7 + $0x10] sm:$0xff] %v71
    %76 = vst [vmem:[#allocation7 + $0x18] sm:$0xff] %v72
    // Predicated region
    $region18: #{tpu_custom_call.1} parent=1 // pred_check
      _
    $region19: #{tpu_custom_call.1} parent=1 // pred_check_branch
      %78 = sbr.rel (0) target = $region21
    $region20: #{tpu_custom_call.1} parent=1 // pred_region
      %s80 = ssub.s32 512, 512
      %81 = vsyncadd [#allocation6], %s80
      %s83 = sshll.u32 [#allocation7], 4
      %s84 = int_to_ptr.vmem [resolvable:$true] %s83
      %86 = dma.vmem_to_hbm [thread:$0]  %s84, 512, %s3, [#allocation6]
    $region21: #{tpu_custom_call.1} parent=1 // pred_fallthru
      _
    // Predicated region
    $region22: #{tpu_custom_call.1} parent=1 // pred_check
      _
    $region23: #{tpu_custom_call.1} parent=1 // pred_check_branch
      %88 = sbr.rel (0) target = $region25
    $region24: #{tpu_custom_call.1} parent=1 // pred_region
      %89 = dma.done [#allocation6], 512
    $region25: #{tpu_custom_call.1} parent=1 // pred_fallthru
      _
    %90 = vsyncpa [#allocation5], 1
    %91 = vsyncpa [#allocation6], 1

</llo_original>
